<compile_context>
chip_gen: v7x
topology: tpu7x:2x2x1
jax: 0.10.0
libtpu: 0.0.40
codegen_flags: <defaults>
</compile_context>

<pallas_src>
import functools

import jax
import jax.numpy as jnp
from jax.experimental import pallas as pl
from jax.experimental.pallas import tpu as pltpu


_VMEM_LIMIT_BYTES = 48 * 1024 * 1024  # < v7x 64 MiB physical; > 16/32 MiB defaults


def _round_up(x, m):
    return (x + m - 1) // m * m


def _sublane(dtype):
    # f32 packs 8 rows per vreg sublane group; bf16/i8 pack 16+.
    return 8 if jnp.dtype(dtype).itemsize >= 4 else 16


def _pick_col_tile(dop):
    for t in (512, 256, 128):
        if dop % t == 0:
            return t
    return dop  # dop is always a multiple of 128, so this is unreachable


# ------------------------- fused LayerNorm + Linear -------------------------

def _prenorm_linear_kernel(x_ref, g_ref, b_ref, w_ref, bias_ref, o_ref, *,
                           eps, d_valid):
    # x_ref: (TR, Dp) rows; normalize each row over the true D (= d_valid),
    # then matmul against the (Dp, TN) weight block and add bias.
    x = x_ref[...].astype(jnp.float32)
    inv_d = 1.0 / d_valid
    mean = jnp.sum(x, axis=-1, keepdims=True) * inv_d  # padded lanes are zero
    xc = x - mean
    lane = jax.lax.broadcasted_iota(jnp.int32, x.shape, dimension=1)
    xc_m = jnp.where(lane < d_valid, xc, 0.0)
    var = jnp.sum(xc_m * xc_m, axis=-1, keepdims=True) * inv_d
    inv = jax.lax.rsqrt(var + eps)
    # gamma/beta are zero-padded -> padded lanes of y are exactly 0, so the
    # padded K rows of W contribute nothing to the matmul.
    y = xc * inv * g_ref[...].astype(jnp.float32) + b_ref[...].astype(jnp.float32)
    acc = jnp.dot(y.astype(x_ref.dtype), w_ref[...],
                  preferred_element_type=jnp.float32)
    o_ref[...] = (acc + bias_ref[...].astype(jnp.float32)).astype(o_ref.dtype)


def fused_prenorm_linear(x, gamma, beta, w, bias, *, eps=1e-5, tile_rows=256):
    """LayerNorm(x) @ w + bias in a single pallas_call.

    x: (..., D); gamma/beta: (D,); w: (D, Dout); bias: (Dout,).
    """
    *lead, D = x.shape
    Dout = w.shape[1]
    x2d = x.reshape(-1, D)
    R = x2d.shape[0]

    sub = _sublane(x.dtype)
    tr = min(_round_up(tile_rows, sub), _round_up(R, sub))
    Rp = _round_up(R, tr)
    Dp = _round_up(D, 128)
    Dop = _round_up(Dout, 128)
    tn = _pick_col_tile(Dop)

    xp = jnp.pad(x2d, ((0, Rp - R), (0, Dp - D)))
    gp = jnp.pad(gamma, (0, Dp - D)).reshape(1, Dp)
    bp = jnp.pad(beta, (0, Dp - D)).reshape(1, Dp)
    wp = jnp.pad(w, ((0, Dp - D), (0, Dop - Dout)))
    biasp = jnp.pad(bias, (0, Dop - Dout)).reshape(1, Dop)

    out = pl.pallas_call(
        functools.partial(_prenorm_linear_kernel, eps=eps, d_valid=D),
        out_shape=jax.ShapeDtypeStruct((Rp, Dop), x.dtype),
        grid_spec=pltpu.PrefetchScalarGridSpec(
            num_scalar_prefetch=0,
            grid=(Rp // tr, Dop // tn),
            in_specs=[
                pl.BlockSpec((tr, Dp), lambda i, j: (i, 0)),
                pl.BlockSpec((1, Dp), lambda i, j: (0, 0)),
                pl.BlockSpec((1, Dp), lambda i, j: (0, 0)),
                pl.BlockSpec((Dp, tn), lambda i, j: (0, j)),
                pl.BlockSpec((1, tn), lambda i, j: (0, j)),
            ],
            out_specs=pl.BlockSpec((tr, tn), lambda i, j: (i, j)),
        ),
        compiler_params=pltpu.CompilerParams(
            dimension_semantics=("parallel", "parallel"),
            vmem_limit_bytes=_VMEM_LIMIT_BYTES),
    )(xp, gp, bp, wp, biasp)

    return out[:R, :Dout].reshape(*lead, Dout)


# --------------------- standalone LayerNorm (fallback fn) --------------------

def _layernorm_kernel(x_ref, g_ref, b_ref, o_ref, *, eps, d_valid):
    x = x_ref[...].astype(jnp.float32)
    inv_d = 1.0 / d_valid
    mean = jnp.sum(x, axis=-1, keepdims=True) * inv_d
    xc = x - mean
    lane = jax.lax.broadcasted_iota(jnp.int32, x.shape, dimension=1)
    xc_m = jnp.where(lane < d_valid, xc, 0.0)
    var = jnp.sum(xc_m * xc_m, axis=-1, keepdims=True) * inv_d
    inv = jax.lax.rsqrt(var + eps)
    y = xc * inv * g_ref[...].astype(jnp.float32) + b_ref[...].astype(jnp.float32)
    o_ref[...] = y.astype(o_ref.dtype)


def layernorm_pallas(x, gamma, beta, *, eps=1e-5, tile_rows=256):
    *lead, D = x.shape
    x2d = x.reshape(-1, D)
    R = x2d.shape[0]

    sub = _sublane(x.dtype)
    tr = min(_round_up(tile_rows, sub), _round_up(R, sub))
    Rp = _round_up(R, tr)
    Dp = _round_up(D, 128)

    xp = jnp.pad(x2d, ((0, Rp - R), (0, Dp - D)))
    gp = jnp.pad(gamma, (0, Dp - D)).reshape(1, Dp)
    bp = jnp.pad(beta, (0, Dp - D)).reshape(1, Dp)

    out = pl.pallas_call(
        functools.partial(_layernorm_kernel, eps=eps, d_valid=D),
        out_shape=jax.ShapeDtypeStruct((Rp, Dp), x.dtype),
        grid_spec=pltpu.PrefetchScalarGridSpec(
            num_scalar_prefetch=0,
            grid=(Rp // tr,),
            in_specs=[
                pl.BlockSpec((tr, Dp), lambda i: (i, 0)),
                pl.BlockSpec((1, Dp), lambda i: (0, 0)),
                pl.BlockSpec((1, Dp), lambda i: (0, 0)),
            ],
            out_specs=pl.BlockSpec((tr, Dp), lambda i: (i, 0)),
        ),
        compiler_params=pltpu.CompilerParams(
            dimension_semantics=("parallel",),
            vmem_limit_bytes=_VMEM_LIMIT_BYTES),
    )(xp, gp, bp)

    return out[:R, :D].reshape(*lead, D)


# ---------------------------- standalone Linear ------------------------------

def _linear_kernel(x_ref, w_ref, b_ref, o_ref):
    acc = jnp.dot(x_ref[...], w_ref[...], preferred_element_type=jnp.float32)
    o_ref[...] = (acc + b_ref[...].astype(jnp.float32)).astype(o_ref.dtype)


def linear_pallas(x, w, bias, *, tile_rows=256):
    """x: (..., Din); w: (Din, Dout) (transposed vs torch nn.Linear); bias: (Dout,)."""
    *lead, Din = x.shape
    Dout = w.shape[1]
    x2d = x.reshape(-1, Din)
    R = x2d.shape[0]

    sub = _sublane(x.dtype)
    tr = min(_round_up(tile_rows, sub), _round_up(R, sub))
    Rp = _round_up(R, tr)
    Dip = _round_up(Din, 128)
    Dop = _round_up(Dout, 128)
    tn = _pick_col_tile(Dop)

    xp = jnp.pad(x2d, ((0, Rp - R), (0, Dip - Din)))
    wp = jnp.pad(w, ((0, Dip - Din), (0, Dop - Dout)))
    bp = jnp.pad(bias, (0, Dop - Dout)).reshape(1, Dop)

    out = pl.pallas_call(
        _linear_kernel,
        out_shape=jax.ShapeDtypeStruct((Rp, Dop), x.dtype),
        grid_spec=pltpu.PrefetchScalarGridSpec(
            num_scalar_prefetch=0,
            grid=(Rp // tr, Dop // tn),
            in_specs=[
                pl.BlockSpec((tr, Dip), lambda i, j: (i, 0)),
                pl.BlockSpec((Dip, tn), lambda i, j: (0, j)),
                pl.BlockSpec((1, tn), lambda i, j: (0, j)),
            ],
            out_specs=pl.BlockSpec((tr, tn), lambda i, j: (i, j)),
        ),
        compiler_params=pltpu.CompilerParams(
            dimension_semantics=("parallel", "parallel"),
            vmem_limit_bytes=_VMEM_LIMIT_BYTES),
    )(xp, wp, bp)

    return out[:R, :Dout].reshape(*lead, Dout)


# --------------------------------- PreNorm -----------------------------------

class PallasLinear:
    """Linear(dim_in -> dim_out); weight stored as (Din, Dout)."""

    def __init__(self, w, b):
        self.w = w
        self.b = b

    def __call__(self, x):
        return linear_pallas(x, self.w, self.b)


class PreNorm:
    """Mirrors the PyTorch module: forward(x, **kw) = fn(LayerNorm(x), **kw)."""

    def __init__(self, dim, fn, gamma=None, beta=None, eps=1e-5):
        self.dim = dim
        self.fn = fn
        self.gamma = gamma if gamma is not None else jnp.ones((dim,), jnp.float32)
        self.beta = beta if beta is not None else jnp.zeros((dim,), jnp.float32)
        self.eps = eps

    def __call__(self, x, **kwargs):
        assert x.shape[-1] == self.dim
        if isinstance(self.fn, PallasLinear) and not kwargs:
            # Fused path: one pallas_call, no HBM round trip for the LN output.
            return fused_prenorm_linear(
                x, self.gamma, self.beta, self.fn.w, self.fn.b, eps=self.eps)
        # Generic fallback: standalone Pallas LayerNorm, then arbitrary fn.
        y = layernorm_pallas(x, self.gamma, self.beta, eps=self.eps)
        return self.fn(y, **kwargs)


if __name__ == "__main__":
    B, S, D = 2, 8, 32
    key = jax.random.PRNGKey(0)
    kx, kg, kb, kw, kbias = jax.random.split(key, 5)

    x = jax.random.normal(kx, (B, S, D), dtype=jnp.float32)

    # Deterministic synthetic parameters (no checkpoint load).
    gamma = 1.0 + 0.1 * jax.random.normal(kg, (D,), dtype=jnp.float32)
    beta = 0.1 * jax.random.normal(kb, (D,), dtype=jnp.float32)
    w = jax.random.normal(kw, (D, D), dtype=jnp.float32) / jnp.sqrt(D)
    bias = 0.1 * jax.random.normal(kbias, (D,), dtype=jnp.float32)

    prenorm = PreNorm(D, PallasLinear(w, bias), gamma, beta)
    out = jax.block_until_ready(prenorm(x))

    # Pure-JAX reference for the fused path.
    def ref(x):
        mean = jnp.mean(x, axis=-1, keepdims=True)
        var = jnp.mean((x - mean) ** 2, axis=-1, keepdims=True)
        y = (x - mean) / jnp.sqrt(var + 1e-5) * gamma + beta
        return y @ w + bias

    assert out.shape == (B, S, D)
    assert jnp.allclose(out, ref(x), atol=1e-4, rtol=1e-4)

    # Also exercise the un-fused fallback path (standalone LN + Linear kernels).
    ln_ref = (x - jnp.mean(x, -1, keepdims=True)) / jnp.sqrt(
        jnp.var(x, -1, keepdims=True) + 1e-5) * gamma + beta
    y_ln = jax.block_until_ready(layernorm_pallas(x, gamma, beta))
    assert jnp.allclose(y_ln, ln_ref, atol=1e-4, rtol=1e-4)
    y_lin = jax.block_until_ready(linear_pallas(y_ln, w, bias))
    assert jnp.allclose(y_lin, ref(x), atol=1e-4, rtol=1e-4)

    print("KERNEL_OK")
</pallas_src>

<mosaic_0001>
module attributes {stable_mosaic.version = 11 : i64} {
  func.func @_prenorm_linear_kernel(%arg0: i32, %arg1: i32, %arg2: memref<16x128xf32, #tpu.memory_space<vmem>>, %arg3: memref<1x128xf32, #tpu.memory_space<vmem>>, %arg4: memref<1x128xf32, #tpu.memory_space<vmem>>, %arg5: memref<128x128xf32, #tpu.memory_space<vmem>>, %arg6: memref<1x128xf32, #tpu.memory_space<vmem>>, %arg7: memref<16x128xf32, #tpu.memory_space<vmem>>) attributes {dimension_semantics = [#tpu.dimension_semantics<parallel>, #tpu.dimension_semantics<parallel>], iteration_bounds = array<i64: 1, 1>, scalar_prefetch = 0 : i64, scratch_operands = 0 : i64, tpu.core_type = #tpu.core_type<tc>, window_params = [{transform_indices = @transform_0, window_bounds = array<i64: 16, 128>}, {pipeline_mode = #tpu.pipeline_mode<synchronous>, transform_indices = @transform_1, window_bounds = array<i64: 1, 128>}, {pipeline_mode = #tpu.pipeline_mode<synchronous>, transform_indices = @transform_2, window_bounds = array<i64: 1, 128>}, {transform_indices = @transform_3, window_bounds = array<i64: 128, 128>}, {transform_indices = @transform_4, window_bounds = array<i64: 1, 128>}, {transform_indices = @transform_5, window_bounds = array<i64: 16, 128>}]} {
    %c0 = arith.constant 0 : index
    %c0_0 = arith.constant 0 : index
    %0 = vector.load %arg2[%c0, %c0_0] : memref<16x128xf32, #tpu.memory_space<vmem>>, vector<16x128xf32>
    %cst = arith.constant dense<0.000000e+00> : vector<16xf32>
    %1 = vector.multi_reduction <add>, %0, %cst [1] : vector<16x128xf32> to vector<16xf32>
    %2 = vector.shape_cast %1 : vector<16xf32> to vector<16x1xf32>
    %cst_1 = arith.constant 3.125000e-02 : f32
    %3 = vector.broadcast %cst_1 : f32 to vector<16x1xf32>
    %4 = arith.mulf %2, %3 : vector<16x1xf32>
    %5 = vector.broadcast %4 : vector<16x1xf32> to vector<16x128xf32>
    %6 = arith.subf %0, %5 : vector<16x128xf32>
    %7 = tpu.iota {dimensions = array<i32: 1>} : vector<16x128xi32>
    %c32_i32 = arith.constant 32 : i32
    %8 = vector.broadcast %c32_i32 : i32 to vector<16x128xi32>
    %9 = arith.cmpi slt, %7, %8 : vector<16x128xi32>
    %cst_2 = arith.constant 0.000000e+00 : f32
    %10 = vector.broadcast %cst_2 : f32 to vector<16x128xf32>
    %11 = arith.select %9, %6, %10 : vector<16x128xi1>, vector<16x128xf32>
    %12 = arith.mulf %11, %11 : vector<16x128xf32>
    %cst_3 = arith.constant dense<0.000000e+00> : vector<16xf32>
    %13 = vector.multi_reduction <add>, %12, %cst_3 [1] : vector<16x128xf32> to vector<16xf32>
    %14 = vector.shape_cast %13 : vector<16xf32> to vector<16x1xf32>
    %cst_4 = arith.constant 3.125000e-02 : f32
    %15 = vector.broadcast %cst_4 : f32 to vector<16x1xf32>
    %16 = arith.mulf %14, %15 : vector<16x1xf32>
    %cst_5 = arith.constant 9.99999974E-6 : f32
    %17 = vector.broadcast %cst_5 : f32 to vector<16x1xf32>
    %18 = arith.addf %16, %17 : vector<16x1xf32>
    %19 = math.rsqrt %18 : vector<16x1xf32>
    %20 = vector.broadcast %19 : vector<16x1xf32> to vector<16x128xf32>
    %21 = arith.mulf %6, %20 : vector<16x128xf32>
    %c0_6 = arith.constant 0 : index
    %c0_7 = arith.constant 0 : index
    %22 = vector.load %arg3[%c0_6, %c0_7] : memref<1x128xf32, #tpu.memory_space<vmem>>, vector<1x128xf32>
    %23 = vector.broadcast %22 : vector<1x128xf32> to vector<16x128xf32>
    %24 = arith.mulf %21, %23 : vector<16x128xf32>
    %c0_8 = arith.constant 0 : index
    %c0_9 = arith.constant 0 : index
    %25 = vector.load %arg4[%c0_8, %c0_9] : memref<1x128xf32, #tpu.memory_space<vmem>>, vector<1x128xf32>
    %26 = vector.broadcast %25 : vector<1x128xf32> to vector<16x128xf32>
    %27 = arith.addf %24, %26 : vector<16x128xf32>
    %c0_10 = arith.constant 0 : index
    %c0_11 = arith.constant 0 : index
    %28 = vector.load %arg5[%c0_10, %c0_11] : memref<128x128xf32, #tpu.memory_space<vmem>>, vector<128x128xf32>
    %cst_12 = arith.constant dense<0.000000e+00> : vector<16x128xf32>
    %29 = tpu.matmul %27, %28, %cst_12 {dimension_numbers = #tpu.dot_dimension_numbers<[1], [0], [0], [1], [0, 0, 1, 1], [], []>} : vector<16x128xf32>, vector<128x128xf32>, vector<16x128xf32> -> vector<16x128xf32>
    %c0_13 = arith.constant 0 : index
    %c0_14 = arith.constant 0 : index
    %30 = vector.load %arg6[%c0_13, %c0_14] : memref<1x128xf32, #tpu.memory_space<vmem>>, vector<1x128xf32>
    %31 = vector.broadcast %30 : vector<1x128xf32> to vector<16x128xf32>
    %32 = arith.addf %29, %31 : vector<16x128xf32>
    %c0_15 = arith.constant 0 : index
    %c0_16 = arith.constant 0 : index
    %33 = vector.load %arg7[%c0_15, %c0_16] : memref<16x128xf32, #tpu.memory_space<vmem>>, vector<16x128xf32>
    tpu.vector_store %arg7[%c0_15, %c0_16], %32 {strides = array<i32>} : memref<16x128xf32, #tpu.memory_space<vmem>>, vector<16x128xf32>,
    return
  }
  func.func @transform_0(%arg0: i32, %arg1: i32) -> (i32, i32) {
    %c0_i32 = arith.constant 0 : i32
    %c0_i32_0 = arith.constant 0 : i32
    return %arg0, %c0_i32 : i32, i32
  }
  func.func @transform_1(%arg0: i32, %arg1: i32) -> (i32, i32) {
    %c0_i32 = arith.constant 0 : i32
    %c0_i32_0 = arith.constant 0 : i32
    %c0_i32_1 = arith.constant 0 : i32
    return %c0_i32, %c0_i32_0 : i32, i32
  }
  func.func @transform_2(%arg0: i32, %arg1: i32) -> (i32, i32) {
    %c0_i32 = arith.constant 0 : i32
    %c0_i32_0 = arith.constant 0 : i32
    %c0_i32_1 = arith.constant 0 : i32
    return %c0_i32, %c0_i32_0 : i32, i32
  }
  func.func @transform_3(%arg0: i32, %arg1: i32) -> (i32, i32) {
    %c0_i32 = arith.constant 0 : i32
    %c0_i32_0 = arith.constant 0 : i32
    return %c0_i32, %arg1 : i32, i32
  }
  func.func @transform_4(%arg0: i32, %arg1: i32) -> (i32, i32) {
    %c0_i32 = arith.constant 0 : i32
    %c0_i32_0 = arith.constant 0 : i32
    return %c0_i32, %arg1 : i32, i32
  }
  func.func @transform_5(%arg0: i32, %arg1: i32) -> (i32, i32) {
    %c0_i32 = arith.constant 0 : i32
    return %arg0, %arg1 : i32, i32
  }
}

</mosaic_0001>

<llo_original>
// kernel: tpu_custom_call.1
$region0: #{tpu_custom_call.1}
  #allocation0 [shape = 'u32[]', space=smem, size = 0x4, offset = 0x4, fixed_abs, tag = 'smem constant byte address 0x4 - core index']
  #allocation1 [shape = 'u32[144,128]{1,0:T(1,128)}', space=vmem, size = 0x12000, scoped, tag = 'internal scratch']
  %s0 = inlined_call_operand.hbm [shape: f32[16,128], index: 0, kind: input, shape index: {}]
  %s1 = inlined_call_operand.vmem [shape: f32[1,128], index: 1, kind: input, shape index: {}]
  %s2 = inlined_call_operand.vmem [shape: f32[1,128], index: 2, kind: input, shape index: {}]
  %s3 = inlined_call_operand.hbm [shape: f32[128,128], index: 3, kind: input, shape index: {}]
  %s4 = inlined_call_operand.vmem [shape: f32[1,128], index: 4, kind: input, shape index: {}]
  %s5 = inlined_call_operand.hbm [shape: f32[16,128], index: 5, kind: output, shape index: {}]
  %s6 = sld [smem:[#allocation0]]
  $region38: #{tpu_custom_call.1} parent=0
    _
  %s8 = ssub.s32 1, %s6
  %s9 = scalar_select 0, %s8, %s6
  $region1: #{tpu_custom_call.1} parent=0
    #allocation2 [shape = 'u8[8192]{0}', space=vmem, size = 0x2000, scoped, tag = 'input window, operand 0, single buffered']
    #allocation3 [shape = 's32[1]{0}', space=sflag, size = 0x4, scoped, tag = 'scoped memory for tpu_custom_call.1']
    #allocation4 [shape = 's32[1]{0}', space=sflag, size = 0x4, scoped, tag = 'scoped memory for tpu_custom_call.1']
    #allocation5 [shape = 'u8[65536]{0}', space=vmem, size = 0x10000, scoped, tag = 'input window, operand 3, single buffered']
    #allocation6 [shape = 's32[1]{0}', space=sflag, size = 0x4, scoped, tag = 'scoped memory for tpu_custom_call.1']
    #allocation7 [shape = 'u8[8192]{0}', space=vmem, size = 0x2000, scoped, tag = 'output window, operand 0, single buffered']
    %10 = vsyncpa [#allocation3], 0
    %11 = vsyncpa [#allocation6], 0
    %12 = vsyncpa [#allocation4], 0
    // Predicated region
    $region2: #{tpu_custom_call.1} parent=1 // pred_check
      _
    $region3: #{tpu_custom_call.1} parent=1 // pred_check_branch
      %14 = sbr.rel (0) target = $region5
    $region4: #{tpu_custom_call.1} parent=1 // pred_region
      %s16 = ssub.s32 256, 256
      %17 = vsyncadd [#allocation3], %s16
      %s18 = sshll.u32 [#allocation2], 4
      %s19 = int_to_ptr.vmem [resolvable:$true] %s18
      %24 = dma.hbm_to_vmem [thread:$0]  %s0, 256, %s19, [#allocation3], 128, 128, 8
    $region5: #{tpu_custom_call.1} parent=1 // pred_fallthru
      _
    // Predicated region
    $region6: #{tpu_custom_call.1} parent=1 // pred_check
      _
    $region7: #{tpu_custom_call.1} parent=1 // pred_check_branch
      %26 = sbr.rel (0) target = $region9
    $region8: #{tpu_custom_call.1} parent=1 // pred_region
      _
    $region9: #{tpu_custom_call.1} parent=1 // pred_fallthru
      _
    // Predicated region
    $region10: #{tpu_custom_call.1} parent=1 // pred_check
      _
    $region11: #{tpu_custom_call.1} parent=1 // pred_check_branch
      %28 = sbr.rel (0) target = $region13
    $region12: #{tpu_custom_call.1} parent=1 // pred_region
      _
    $region13: #{tpu_custom_call.1} parent=1 // pred_fallthru
      _
    // Predicated region
    $region14: #{tpu_custom_call.1} parent=1 // pred_check
      _
    $region15: #{tpu_custom_call.1} parent=1 // pred_check_branch
      %30 = sbr.rel (0) target = $region17
    $region16: #{tpu_custom_call.1} parent=1 // pred_region
      %s32 = ssub.s32 2048, 2048
      %33 = vsyncadd [#allocation6], %s32
      %s34 = sshll.u32 [#allocation5], 4
      %s35 = int_to_ptr.vmem [resolvable:$true] %s34
      %40 = dma.hbm_to_vmem [thread:$0]  %s3, 2048, %s35, [#allocation6], 128, 128, 8
    $region17: #{tpu_custom_call.1} parent=1 // pred_fallthru
      _
    // Predicated region
    $region18: #{tpu_custom_call.1} parent=1 // pred_check
      _
    $region19: #{tpu_custom_call.1} parent=1 // pred_check_branch
      %42 = sbr.rel (0) target = $region21
    $region20: #{tpu_custom_call.1} parent=1 // pred_region
      _
    $region21: #{tpu_custom_call.1} parent=1 // pred_fallthru
      _
    // Predicated region
    $region22: #{tpu_custom_call.1} parent=1 // pred_check
      _
    $region23: #{tpu_custom_call.1} parent=1 // pred_check_branch
      %44 = sbr.rel (0) target = $region25
    $region24: #{tpu_custom_call.1} parent=1 // pred_region
      %45 = dma.done [#allocation3], 256
    $region25: #{tpu_custom_call.1} parent=1 // pred_fallthru
      _
    // Predicated region
    $region26: #{tpu_custom_call.1} parent=1 // pred_check
      _
    $region27: #{tpu_custom_call.1} parent=1 // pred_check_branch
      %47 = sbr.rel (0) target = $region29
    $region28: #{tpu_custom_call.1} parent=1 // pred_region
      %48 = dma.done [#allocation6], 2048
    $region29: #{tpu_custom_call.1} parent=1 // pred_fallthru
      _
    %v49 = vld [vmem:[#allocation2] sm:$0xff]
    %v50 = vld [vmem:[#allocation2 + $0x8] sm:$0xff]
    %51 = vadd.xlane.f32.xlu0 %v49
    %v52 = vpop.xlane.xlu0 %51
    %53 = vadd.xlane.f32.xlu0 %v50
    %v54 = vpop.xlane.xlu0 %53
    %v55 = vmul.f32 %v52, 0.03125
    %v56 = vmul.f32 %v54, 0.03125
    %v57 = vsub.f32 %v49, %v55
    %v58 = vsub.f32 %v50, %v56
    %v59 = vlaneseq
    %v60 = vand.u32 %v59, 127
    %vm61 = vcmp.lt.s32.totalorder %v60, 32
    %v62 = vsel %vm61, %v57, 0.0
    %v63 = vsel %vm61, %v58, 0.0
    %v64 = vmul.f32 %v62, %v62
    %v65 = vmul.f32 %v63, %v63
    %66 = vadd.xlane.f32.xlu0 %v64
    %v67 = vpop.xlane.xlu0 %66
    %68 = vadd.xlane.f32.xlu0 %v65
    %v69 = vpop.xlane.xlu0 %68
    %v70 = vmul.f32 %v67, 0.03125
    %v71 = vmul.f32 %v69, 0.03125
    %v72 = vadd.f32 %v70, 1e-05
    %v73 = vadd.f32 %v71, 1e-05
    %v74 = vrsqrt.pop %v72
    %v75 = vrsqrt.pop %v73
    %v76 = vmul.f32 %v57, %v74
    %v77 = vmul.f32 %v58, %v75
    %v78 = vld [vmem:[%s1] sm:$0x1]
    %v80 = vlaneseq
    %v81 = vshrl.u32 %v80, 7
    %v82 = vsub.s32 0, %v81
    %v83 = vrot.slane %v78, %v82
    %v85 = vmul.f32 %v76, %v83
    %v86 = vmul.f32 %v77, %v83
    %v87 = vld [vmem:[%s2] sm:$0x1]
    %v89 = vlaneseq
    %v90 = vshrl.u32 %v89, 7
    %v91 = vsub.s32 0, %v90
    %v92 = vrot.slane %v87, %v91
    %v94 = vadd.f32 %v85, %v92
    %v95 = vadd.f32 %v86, %v92
    %v96 = vld [vmem:[#allocation5] sm:$0xff]
    %v97 = vld [vmem:[#allocation5 + $0x8] sm:$0xff]
    %v98 = vld [vmem:[#allocation5 + $0x10] sm:$0xff]
    %v99 = vld [vmem:[#allocation5 + $0x18] sm:$0xff]
    %v100 = vld [vmem:[#allocation5 + $0x20] sm:$0xff]
    %v101 = vld [vmem:[#allocation5 + $0x28] sm:$0xff]
    %v102 = vld [vmem:[#allocation5 + $0x30] sm:$0xff]
    %v103 = vld [vmem:[#allocation5 + $0x38] sm:$0xff]
    %v104 = vld [vmem:[#allocation5 + $0x40] sm:$0xff]
    %v105 = vld [vmem:[#allocation5 + $0x48] sm:$0xff]
    %v106 = vld [vmem:[#allocation5 + $0x50] sm:$0xff]
    %v107 = vld [vmem:[#allocation5 + $0x58] sm:$0xff]
    %v108 = vld [vmem:[#allocation5 + $0x60] sm:$0xff]
    %v109 = vld [vmem:[#allocation5 + $0x68] sm:$0xff]
    %v110 = vld [vmem:[#allocation5 + $0x70] sm:$0xff]
    %v111 = vld [vmem:[#allocation5 + $0x78] sm:$0xff]
    %v112 = vld [vmem:[%s4] sm:$0x1]
    %v114 = vlaneseq
    %v115 = vshrl.u32 %v114, 7
    %v116 = vsub.s32 0, %v115
    %v117 = vrot.slane %v112, %v116
    %119 = vmatprep.subr.mxu0 0.0
    %120 = vmatpush1.msra.mxu0 %v96
    %121 = vmatprep.subr.mxu0 0.0
    %122 = vmatpush1.msra.mxu0 %v97
    %123 = vmatprep.subr.mxu0 0.0
    %124 = vmatpush1.msra.mxu0 %v98
    %125 = vmatprep.subr.mxu0 0.0
    %126 = vmatpush1.msra.mxu0 %v99
    %127 = vmatprep.subr.mxu0 0.0
    %128 = vmatpush1.msra.mxu0 %v100
    %129 = vmatprep.subr.mxu0 0.0
    %130 = vmatpush1.msra.mxu0 %v101
    %131 = vmatprep.subr.mxu0 0.0
    %132 = vmatpush1.msra.mxu0 %v102
    %133 = vmatprep.subr.mxu0 0.0
    %134 = vmatpush1.msra.mxu0 %v103
    %135 = vmatprep.subr.mxu0 0.0
    %136 = vmatpush1.msra.mxu0 %v104
    %137 = vmatprep.subr.mxu0 0.0
    %138 = vmatpush1.msra.mxu0 %v105
    %139 = vmatprep.subr.mxu0 0.0
    %140 = vmatpush1.msra.mxu0 %v106
    %141 = vmatprep.subr.mxu0 0.0
    %142 = vmatpush1.msra.mxu0 %v107
    %143 = vmatprep.subr.mxu0 0.0
    %144 = vmatpush1.msra.mxu0 %v108
    %145 = vmatprep.subr.mxu0 0.0
    %146 = vmatpush1.msra.mxu0 %v109
    %147 = vmatprep.subr.mxu0 0.0
    %148 = vmatpush1.msra.mxu0 %v110
    %149 = vmatprep.subr.mxu0 0.0
    %150 = vmatpush1.msra.mxu0 %v111
    %151 = vmatprep.subr.mxu0 0.0
    %152 = vmatpush1.msra.mxu0 0.0
    %153 = vmatprep.subr.mxu0 0.0
    %154 = vmatpush1.msra.mxu0 0.0
    %155 = vmatprep.subr.mxu0 0.0
    %156 = vmatpush1.msra.mxu0 0.0
    %157 = vmatprep.subr.mxu0 0.0
    %158 = vmatpush1.msra.mxu0 0.0
    %159 = vmatprep.subr.mxu0 0.0
    %160 = vmatpush1.msra.mxu0 0.0
    %161 = vmatprep.subr.mxu0 0.0
    %162 = vmatpush1.msra.mxu0 0.0
    %163 = vmatprep.subr.mxu0 0.0
    %164 = vmatpush1.msra.mxu0 0.0
    %165 = vmatprep.subr.mxu0 0.0
    %166 = vmatpush1.msra.mxu0 0.0
    %167 = vmatprep.subr.mxu0 0.0
    %168 = vmatpush1.msra.mxu0 0.0
    %169 = vmatprep.subr.mxu0 0.0
    %170 = vmatpush1.msra.mxu0 0.0
    %171 = vmatprep.subr.mxu0 0.0
    %172 = vmatpush1.msra.mxu0 0.0
    %173 = vmatprep.subr.mxu0 0.0
    %174 = vmatpush1.msra.mxu0 0.0
    %175 = vmatprep.subr.mxu0 0.0
    %176 = vmatpush1.msra.mxu0 0.0
    %177 = vmatprep.subr.mxu0 0.0
    %178 = vmatpush1.msra.mxu0 0.0
    %179 = vmatprep.subr.mxu0 0.0
    %180 = vmatpush1.msra.mxu0 0.0
    %181 = vmatprep.subr.mxu0 0.0
    %182 = vmatpush1.msra.mxu0 0.0
    %183 = vmatprep.mubr.f32.mxu0 0.0
    %184 = vmatmul.mubr.f32.gmra.mrb[0].mxu0 %v94
    %v185 = vpop.f32.mrb[0].mxu0
    %v186 = vadd.f32 %v117, %v185
    %v187 = vpop.f32.mrb[0].mxu0
    %188 = vmatprep.mubr.f32.mxu0 0.0
    %189 = vmatmul.mubr.f32.gmra.mrb[0].mxu0 %v95
    %v190 = vpop.f32.mrb[0].mxu0
    %v191 = vadd.f32 %v117, %v190
    %v192 = vpop.f32.mrb[0].mxu0
    %193 = vdwg.mxu0
    %194 = vst [vmem:[#allocation7] sm:$0xff] %v186
    %195 = vst [vmem:[#allocation7 + $0x8] sm:$0xff] %v191
    // Predicated region
    $region30: #{tpu_custom_call.1} parent=1 // pred_check
      _
    $region31: #{tpu_custom_call.1} parent=1 // pred_check_branch
      %197 = sbr.rel (0) target = $region33
    $region32: #{tpu_custom_call.1} parent=1 // pred_region
      %s199 = ssub.s32 256, 256
      %200 = vsyncadd [#allocation4], %s199
      %s201 = sshll.u32 [#allocation7], 4
      %s202 = int_to_ptr.vmem [resolvable:$true] %s201
      %207 = dma.vmem_to_hbm [thread:$0]  %s202, 256, %s5, [#allocation4], 128, 128, 8
    $region33: #{tpu_custom_call.1} parent=1 // pred_fallthru
      _
    // Predicated region
    $region34: #{tpu_custom_call.1} parent=1 // pred_check
      _
    $region35: #{tpu_custom_call.1} parent=1 // pred_check_branch
      %209 = sbr.rel (0) target = $region37
    $region36: #{tpu_custom_call.1} parent=1 // pred_region
      %210 = dma.done [#allocation4], 256
    $region37: #{tpu_custom_call.1} parent=1 // pred_fallthru
      _
    %211 = vsyncpa [#allocation3], 1
    %212 = vsyncpa [#allocation6], 1
    %213 = vsyncpa [#allocation4], 1

</llo_original>
